<compile_context>
chip_gen: v6e
topology: v6e:2x2x1
jax: 0.10.0
libtpu: 0.0.40
codegen_flags: <defaults>
</compile_context>

<pallas_src>
import functools

import numpy as np

import jax
import jax.numpy as jnp
from jax import lax
from jax.experimental import pallas as pl
from jax.experimental.pallas import tpu as pltpu


def _round_up(n, m):
    return ((n + m - 1) // m) * m


def _pad2(a, rows, cols):
    pr, pc = rows - a.shape[0], cols - a.shape[1]
    if pr == 0 and pc == 0:
        return a
    return jnp.pad(a, ((0, pr), (0, pc)))


def _tpu_vmem_capacity_bytes():
    """Per-core VMEM capacity in bytes, or None if it cannot be queried."""
    try:
        cap = getattr(pltpu.get_tpu_info(), "vmem_capacity_bytes", None)
        return int(cap) if cap else None
    except Exception:
        return None


def _choose_tile_l(Bp, Dp, L, w_itemsize, sparse_itemsize, budget_bytes):
    """Largest latent tile (multiple of 256; 128 only as last resort) whose
    double-buffered streamed working set plus resident buffers fits the
    generation-aware VMEM budget."""
    resident = Bp * Dp * (w_itemsize + 4) + Dp * 4       # x + decoded + bd
    l_cap = _round_up(L, 128)
    for cand in (4096, 2048, 1024, 512, 256, 128):
        if cand > l_cap:
            continue
        streamed = 2 * (2 * cand * Dp * w_itemsize       # we tile + wd^T tile
                        + cand * 4                       # be tile
                        + Bp * cand * sparse_itemsize)   # sparse out tile
        if resident + streamed <= budget_bytes:
            return cand
    return 128


def _sae_kernel(x_ref, we_ref, be_ref, wdt_ref, bd_ref, dec_ref, sparse_ref,
                *, k, valid_b):
    """One latent tile: encode -> batch top-k -> write sparse tile ->
    accumulate decoder partial into the resident decoded block.

    Shapes (per grid step (s, l)):
      x_ref      : (Bp, Dp)      resident, matmul dtype (bf16 or f32)
      we_ref     : (tile_l, Dp)  streamed encoder weight row tile
      be_ref     : (1, tile_l)   encoder bias tile (f32)
      wdt_ref    : (tile_l, Dp)  streamed decoder weight row tile (pre-transposed)
      bd_ref     : (1, Dp)       decoder bias (f32)
      dec_ref    : (Bp, Dp) f32  decoded partial of split s (VMEM-resident
                                 across l; accumulated directly, no scratch)
      sparse_ref : (Bp, tile_l)  sparse output tile
    """
    s = pl.program_id(0)
    l = pl.program_id(1)

    # Initialize the resident decoded block once per split.  Only split 0
    # carries the decoder bias; split partials are summed outside the kernel.
    @pl.when(l == 0)
    def _():
        bias_scale = jnp.where(s == 0, 1.0, 0.0).astype(jnp.float32)
        dec_ref[...] = jnp.broadcast_to(bd_ref[...] * bias_scale, dec_ref.shape)

    # ---- encoder tile: (Bp, Dp) x (tile_l, Dp)^T -> (Bp, tile_l) on the MXU.
    enc = lax.dot_general(
        x_ref[...], we_ref[...],
        dimension_numbers=(((1,), (1,)), ((), ())),
        preferred_element_type=jnp.float32)
    enc = enc + be_ref[...]                               # (1, tile_l) bcast

    Bp, tl = enc.shape
    row = lax.broadcasted_iota(jnp.int32, (Bp, tl), 0)
    int_min = jnp.iinfo(jnp.int32).min

    # ---- batch top-k over the batch (sublane) axis, per latent column.
    # Selection runs in a monotone int32 key domain: the f32 value is mapped
    # to a sign-flipped sortable int and its low ceil(log2(Bp)) bits are
    # replaced by (R-1-row), so (a) the per-column max is unique -> ONE XLU
    # reduce per pass (no tie-break min-reduce), (b) exact ties resolve to
    # the lowest row (matching torch.topk / lax.top_k).  Values closer than
    # ~Bp ulps may have their selection order perturbed; enc is assumed
    # finite (NaNs are not sanitized).  Selected VALUES are exact (taken from
    # enc via the final where).
    u = pltpu.bitcast(enc, jnp.int32)
    vkey = jnp.where(u < 0, u ^ jnp.int32(0x7FFFFFFF), u)
    r_pow2 = 1 << (Bp - 1).bit_length() if Bp > 1 else 1
    key = (vkey & jnp.int32(~(r_pow2 - 1))) | (jnp.int32(r_pow2 - 1) - row)
    if valid_b < Bp:   # exclude zero-padded batch rows from selection
        key = jnp.where(row < valid_b, key, int_min)

    def _select_pass(carry):
        key, mask = carry
        col_max = jnp.max(key, axis=0, keepdims=True)     # one reduce per pass
        sel = key == col_max                              # exactly one row/col
        return jnp.where(sel, int_min, key), jnp.logical_or(mask, sel)

    mask = jnp.zeros((Bp, tl), jnp.bool_)
    # TODO(synk): for k >~ 32 replace the serial passes with a per-column
    # k-th-order-statistic threshold (bitwise binary search on the key,
    # O(32) passes independent of k, + lower-triangular-matmul tie counting).
    if k <= 16:
        for _ in range(k):
            key, mask = _select_pass((key, mask))
    else:
        key, mask = lax.fori_loop(0, k, lambda i, c: _select_pass(c),
                                  (key, mask))

    sparse = jnp.where(mask, enc, 0.0)
    sparse_ref[...] = sparse.astype(sparse_ref.dtype)

    # ---- decoder partial: (Bp, tile_l) x (tile_l, Dp) -> (Bp, Dp),
    # accumulated directly into the resident decoded output block.
    dec_ref[...] += lax.dot_general(
        sparse.astype(wdt_ref.dtype), wdt_ref[...],
        dimension_numbers=(((1,), (0,)), ((), ())),
        preferred_element_type=jnp.float32)


def batch_topk_sae_forward(x, we, be, wd, bd, top_k_percentage=0.01,
                           matmul_dtype=jnp.bfloat16,
                           sparse_dtype=jnp.float32,
                           num_core_splits=None):
    """x: (B, D); we: (L, D); be: (L,); wd: (D, L); bd: (D,).

    Returns (decoded (B, D) f32, sparse_encoded (B, L) sparse_dtype).
    sparse_dtype=jnp.bfloat16 halves the dominant HBM write at large B; the
    default stays f32 to match the PyTorch module exactly.
    """
    B, D = x.shape
    L = we.shape[0]
    assert we.shape == (L, D) and wd.shape == (D, L)
    k = max(1, int(B * top_k_percentage))
    if k > B:
        raise ValueError(f"batch top-k k={k} exceeds batch size {B}")

    w_bytes = np.dtype(matmul_dtype).itemsize
    sp_bytes = np.dtype(sparse_dtype).itemsize

    # Generation-aware VMEM sizing: ~70% of per-core capacity for the tile
    # budget, hard cap at 87.5% for vmem_limit (<=56 MiB on v7x's 64 MiB,
    # <=112 MiB on 128 MiB v5e/v6e); conservative 64 MiB if undetectable.
    vmem_cap = _tpu_vmem_capacity_bytes()
    cap = vmem_cap if vmem_cap is not None else (64 << 20)
    budget = int(0.70 * cap)
    hard_cap = int(0.875 * cap)

    if num_core_splits is None:
        # v7x (64 MiB/core VMEM) has two TensorCores per chip: split the
        # latent axis across them.  v5e/v6e have a single core.
        num_core_splits = 2 if (vmem_cap is not None
                                and vmem_cap <= (64 << 20)) else 1
    S = max(1, int(num_core_splits))

    Bp = _round_up(B, 8)        # sublane alignment
    Dp = _round_up(D, 128)      # lane-dense x loads / decoded stores
    tile_l = _choose_tile_l(Bp, Dp, L, w_bytes, sp_bytes, budget)
    Lp = _round_up(L, tile_l * S)
    num_l = Lp // tile_l
    nl = num_l // S             # latent tiles per split

    resident = Bp * Dp * (w_bytes + 4) + Dp * 4
    streamed = 2 * (2 * tile_l * Dp * w_bytes + tile_l * 4
                    + Bp * tile_l * sp_bytes)
    need = resident + streamed
    if need > hard_cap:
        # TODO(synk): add a batch/D tiling fallback (D grid axis + encoder
        # accumulator) instead of failing for huge B*D resident sets.
        raise ValueError(f"VMEM need {need >> 20} MiB exceeds "
                         f"{hard_cap >> 20} MiB per-core budget")
    vmem_limit = int(min(max(need + (8 << 20), 32 << 20), hard_cap))

    # NOTE: in production, store params pre-cast to matmul_dtype and the
    # decoder weight pre-transposed to (L, D) so these pads / the transpose
    # are free.  The (L, D) layout makes each streamed decoder tile one
    # contiguous row-slice DMA and the decoder matmul a plain NN contraction.
    x_p = _pad2(x, Bp, Dp).astype(matmul_dtype)
    we_p = _pad2(we, Lp, Dp).astype(matmul_dtype)            # (Lp, Dp)
    wdt_p = _pad2(wd.T, Lp, Dp).astype(matmul_dtype)         # (Lp, Dp)
    be_p = _pad2(be.astype(jnp.float32).reshape(1, L), 1, Lp)
    bd_p = _pad2(bd.astype(jnp.float32).reshape(1, D), 1, Dp)

    kernel = functools.partial(_sae_kernel, k=k, valid_b=B)

    grid_spec = pltpu.PrefetchScalarGridSpec(
        num_scalar_prefetch=0,
        grid=(S, nl),
        in_specs=[
            pl.BlockSpec((Bp, Dp), lambda s, l: (0, 0)),              # x
            pl.BlockSpec((tile_l, Dp), lambda s, l: (s * nl + l, 0)),  # we tile
            pl.BlockSpec((1, tile_l), lambda s, l: (0, s * nl + l)),   # be tile
            pl.BlockSpec((tile_l, Dp), lambda s, l: (s * nl + l, 0)),  # wd^T tile
            pl.BlockSpec((1, Dp), lambda s, l: (0, 0)),               # bd
        ],
        out_specs=(
            pl.BlockSpec((None, Bp, Dp), lambda s, l: (s, 0, 0)),      # decoded
            pl.BlockSpec((Bp, tile_l), lambda s, l: (0, s * nl + l)),  # sparse
        ),
    )
    # TODO(synk): in the small-B weight-streaming regime, pipeline_mode=
    # pl.Buffered(3) on the two weight BlockSpecs can smooth DMA jitter.

    bytes_accessed = (Bp * Dp * w_bytes            # x
                      + 2 * Lp * Dp * w_bytes      # encoder + decoder weights
                      + Lp * 4 + Dp * 4            # biases
                      + S * Bp * Dp * 4            # decoded partial(s)
                      + Bp * Lp * sp_bytes)        # sparse out

    dec_p, sparse_p = pl.pallas_call(
        kernel,
        out_shape=(
            jax.ShapeDtypeStruct((S, Bp, Dp), jnp.float32),
            jax.ShapeDtypeStruct((Bp, Lp), sparse_dtype),
        ),
        grid_spec=grid_spec,
        compiler_params=pltpu.CompilerParams(
            dimension_semantics=("parallel", "arbitrary"),
            vmem_limit_bytes=vmem_limit,
        ),
        cost_estimate=pl.CostEstimate(
            flops=4 * Bp * Dp * Lp,                # encoder + decoder matmuls
            transcendentals=0,
            bytes_accessed=int(bytes_accessed),
        ),
    )(x_p, we_p, be_p, wdt_p, bd_p)

    decoded = dec_p[0] if S == 1 else jnp.sum(dec_p, axis=0)
    return decoded[:B, :D], sparse_p[:B, :L]


def _reference_forward(x, we, be, wd, bd, top_k_percentage=0.01,
                       matmul_dtype=jnp.float32):
    """Pure-JAX reference mirroring the PyTorch module (optionally with the
    same matmul-input cast the kernel fast path uses)."""
    B = x.shape[0]
    k = max(1, int(B * top_k_percentage))
    enc = jnp.dot(x.astype(matmul_dtype), we.astype(matmul_dtype).T,
                  preferred_element_type=jnp.float32) + be
    _, idx = lax.top_k(enc.T, k)                  # (L, k) row indices
    mask = jnp.zeros_like(enc)
    cols = jnp.arange(enc.shape[1])
    for i in range(k):
        mask = mask.at[idx[:, i], cols].set(1.0)
    sparse = enc * mask
    dec = jnp.dot(sparse.astype(matmul_dtype), wd.astype(matmul_dtype).T,
                  preferred_element_type=jnp.float32) + bd
    return dec, sparse


def _check(x, we, be, wd, bd, pct, matmul_dtype, atol, rtol, **kw):
    dec, sp = batch_topk_sae_forward(x, we, be, wd, bd, pct,
                                     matmul_dtype=matmul_dtype, **kw)
    jax.block_until_ready((dec, sp))
    ref_dec, ref_sp = _reference_forward(x, we, be, wd, bd, pct,
                                         matmul_dtype=matmul_dtype)
    assert jnp.allclose(sp, ref_sp, atol=atol, rtol=rtol), "sparse mismatch"
    assert jnp.allclose(dec, ref_dec, atol=atol, rtol=rtol), "decoded mismatch"


if __name__ == "__main__":
    key = jax.random.PRNGKey(0)
    input_dim, latent_dim = 64, 128

    k_x, k_we, k_be, k_wd, k_bd, k_x2 = jax.random.split(key, 6)
    # Deterministic "Linear"-style init (synthetic, not a checkpoint load).
    be_bound = 1.0 / (input_dim ** 0.5)
    bd_bound = 1.0 / (latent_dim ** 0.5)
    we = jax.random.uniform(k_we, (latent_dim, input_dim), jnp.float32,
                            -be_bound, be_bound)
    be = jax.random.uniform(k_be, (latent_dim,), jnp.float32,
                            -be_bound, be_bound)
    wd = jax.random.uniform(k_wd, (input_dim, latent_dim), jnp.float32,
                            -bd_bound, bd_bound)
    bd = jax.random.uniform(k_bd, (input_dim,), jnp.float32,
                            -bd_bound, bd_bound)

    x8 = jax.random.normal(k_x, (8, input_dim), dtype=jnp.float32)
    x12 = jax.random.normal(k_x2, (12, input_dim), dtype=jnp.float32)

    # 1) f32 matmuls, k=1: exact vs the f32 module reference.
    _check(x8, we, be, wd, bd, 0.01, jnp.float32, 1e-5, 1e-5)
    # 2) batch padding (12 -> 16 rows) and k=3.
    _check(x12, we, be, wd, bd, 0.25, jnp.float32, 1e-5, 1e-5)
    # 3) forced latent split (v7x two-TensorCore path), exercised on any chip.
    _check(x8, we, be, wd, bd, 0.01, jnp.float32, 1e-5, 1e-5,
           num_core_splits=2)
    # 4) default fast path: bf16 matmul inputs, f32 accumulation + selection.
    _check(x8, we, be, wd, bd, 0.01, jnp.bfloat16, 2e-3, 2e-3)

    print("KERNEL_OK")
</pallas_src>

<mosaic_0001>
module attributes {stable_mosaic.version = 11 : i64} {
  func.func @_sae_kernel(%arg0: i32, %arg1: i32, %arg2: memref<8x128xf32, #tpu.memory_space<vmem>>, %arg3: memref<128x128xf32, #tpu.memory_space<vmem>>, %arg4: memref<1x128xf32, #tpu.memory_space<vmem>>, %arg5: memref<128x128xf32, #tpu.memory_space<vmem>>, %arg6: memref<1x128xf32, #tpu.memory_space<vmem>>, %arg7: memref<1x8x128xf32, #tpu.memory_space<vmem>>, %arg8: memref<8x128xf32, #tpu.memory_space<vmem>>) attributes {dimension_semantics = [#tpu.dimension_semantics<parallel>, #tpu.dimension_semantics<arbitrary>], iteration_bounds = array<i64: 1, 1>, scalar_prefetch = 0 : i64, scratch_operands = 0 : i64, tpu.core_type = #tpu.core_type<tc>, window_params = [{pipeline_mode = #tpu.pipeline_mode<synchronous>, transform_indices = @transform_0, window_bounds = array<i64: 8, 128>}, {transform_indices = @transform_1, window_bounds = array<i64: 128, 128>}, {transform_indices = @transform_2, window_bounds = array<i64: 1, 128>}, {transform_indices = @transform_3, window_bounds = array<i64: 128, 128>}, {pipeline_mode = #tpu.pipeline_mode<synchronous>, transform_indices = @transform_4, window_bounds = array<i64: 1, 128>}, {transform_indices = @transform_5, window_bounds = array<i64: 1, 8, 128>}, {transform_indices = @transform_6, window_bounds = array<i64: 8, 128>}]} {
    %c0_i32 = arith.constant 0 : i32
    %0 = arith.cmpi eq, %arg1, %c0_i32 : i32
    %1 = arith.extui %0 : i1 to i32
    %c0_i32_0 = arith.constant 0 : i32
    %2 = arith.cmpi ne, %1, %c0_i32_0 : i32
    scf.if %2 {
      %c0_i32_20 = arith.constant 0 : i32
      %38 = arith.cmpi eq, %arg0, %c0_i32_20 : i32
      %cst_21 = arith.constant 1.000000e+00 : f32
      %cst_22 = arith.constant 0.000000e+00 : f32
      %39 = arith.select %38, %cst_21, %cst_22 : f32
      %c0_23 = arith.constant 0 : index
      %c0_24 = arith.constant 0 : index
      %40 = vector.load %arg6[%c0_23, %c0_24] : memref<1x128xf32, #tpu.memory_space<vmem>>, vector<1x128xf32>
      %41 = vector.broadcast %39 : f32 to vector<1x128xf32>
      %42 = arith.mulf %40, %41 : vector<1x128xf32>
      %43 = vector.shape_cast %42 : vector<1x128xf32> to vector<1x128xf32>
      %44 = vector.broadcast %43 : vector<1x128xf32> to vector<8x128xf32>
      %c0_25 = arith.constant 0 : index
      %c0_26 = arith.constant 0 : index
      %c0_27 = arith.constant 0 : index
      %45 = vector.load %arg7[%c0_25, %c0_26, %c0_27] : memref<1x8x128xf32, #tpu.memory_space<vmem>>, vector<1x8x128xf32>
      %46 = vector.shape_cast %45 : vector<1x8x128xf32> to vector<8x128xf32>
      %47 = vector.shape_cast %44 : vector<8x128xf32> to vector<1x8x128xf32>
      tpu.vector_store %arg7[%c0_25, %c0_26, %c0_27], %47 {strides = array<i32>} : memref<1x8x128xf32, #tpu.memory_space<vmem>>, vector<1x8x128xf32>,
    } else {
    }
    %c0 = arith.constant 0 : index
    %c0_1 = arith.constant 0 : index
    %3 = vector.load %arg2[%c0, %c0_1] : memref<8x128xf32, #tpu.memory_space<vmem>>, vector<8x128xf32>
    %c0_2 = arith.constant 0 : index
    %c0_3 = arith.constant 0 : index
    %4 = vector.load %arg3[%c0_2, %c0_3] : memref<128x128xf32, #tpu.memory_space<vmem>>, vector<128x128xf32>
    %cst = arith.constant dense<0.000000e+00> : vector<8x128xf32>
    %5 = tpu.matmul %3, %4, %cst {dimension_numbers = #tpu.dot_dimension_numbers<[1], [1], [0], [0], [0, 0, 1, 0], [], []>} : vector<8x128xf32>, vector<128x128xf32>, vector<8x128xf32> -> vector<8x128xf32>
    %c0_4 = arith.constant 0 : index
    %c0_5 = arith.constant 0 : index
    %6 = vector.load %arg4[%c0_4, %c0_5] : memref<1x128xf32, #tpu.memory_space<vmem>>, vector<1x128xf32>
    %7 = vector.broadcast %6 : vector<1x128xf32> to vector<8x128xf32>
    %8 = arith.addf %5, %7 : vector<8x128xf32>
    %9 = tpu.iota {dimensions = array<i32: 0>} : vector<8x128xi32>
    %10 = tpu.bitcast %8 : vector<8x128xf32> -> vector<8x128xi32>
    %c0_i32_6 = arith.constant 0 : i32
    %11 = vector.broadcast %c0_i32_6 : i32 to vector<8x128xi32>
    %12 = arith.cmpi slt, %10, %11 : vector<8x128xi32>
    %c2147483647_i32 = arith.constant 2147483647 : i32
    %13 = vector.broadcast %c2147483647_i32 : i32 to vector<8x128xi32>
    %14 = arith.xori %10, %13 : vector<8x128xi32>
    %15 = arith.select %12, %14, %10 : vector<8x128xi1>, vector<8x128xi32>
    %c-8_i32 = arith.constant -8 : i32
    %16 = vector.broadcast %c-8_i32 : i32 to vector<8x128xi32>
    %17 = arith.andi %15, %16 : vector<8x128xi32>
    %c7_i32 = arith.constant 7 : i32
    %18 = vector.broadcast %c7_i32 : i32 to vector<8x128xi32>
    %19 = arith.subi %18, %9 : vector<8x128xi32>
    %20 = arith.ori %17, %19 : vector<8x128xi32>
    %false = arith.constant false
    %21 = vector.broadcast %false : i1 to vector<8x128xi1>
    %cst_7 = arith.constant dense<-2147483648> : vector<128xi32>
    %22 = vector.multi_reduction <maxsi>, %20, %cst_7 [0] : vector<8x128xi32> to vector<128xi32>
    %23 = vector.shape_cast %22 : vector<128xi32> to vector<1x128xi32>
    %24 = vector.broadcast %23 : vector<1x128xi32> to vector<8x128xi32>
    %25 = arith.cmpi eq, %20, %24 : vector<8x128xi32>
    %26 = arith.ori %21, %25 : vector<8x128xi1>
    %cst_8 = arith.constant 0.000000e+00 : f32
    %27 = vector.broadcast %cst_8 : f32 to vector<8x128xf32>
    %28 = arith.select %26, %8, %27 : vector<8x128xi1>, vector<8x128xf32>
    %c0_9 = arith.constant 0 : index
    %c0_10 = arith.constant 0 : index
    %29 = vector.load %arg8[%c0_9, %c0_10] : memref<8x128xf32, #tpu.memory_space<vmem>>, vector<8x128xf32>
    tpu.vector_store %arg8[%c0_9, %c0_10], %28 {strides = array<i32>} : memref<8x128xf32, #tpu.memory_space<vmem>>, vector<8x128xf32>,
    %c0_11 = arith.constant 0 : index
    %c0_12 = arith.constant 0 : index
    %c0_13 = arith.constant 0 : index
    %30 = vector.load %arg7[%c0_11, %c0_12, %c0_13] : memref<1x8x128xf32, #tpu.memory_space<vmem>>, vector<1x8x128xf32>
    %31 = vector.shape_cast %30 : vector<1x8x128xf32> to vector<8x128xf32>
    %c0_14 = arith.constant 0 : index
    %c0_15 = arith.constant 0 : index
    %32 = vector.load %arg5[%c0_14, %c0_15] : memref<128x128xf32, #tpu.memory_space<vmem>>, vector<128x128xf32>
    %cst_16 = arith.constant dense<0.000000e+00> : vector<8x128xf32>
    %33 = tpu.matmul %28, %32, %cst_16 {dimension_numbers = #tpu.dot_dimension_numbers<[1], [0], [0], [1], [0, 0, 1, 1], [], []>} : vector<8x128xf32>, vector<128x128xf32>, vector<8x128xf32> -> vector<8x128xf32>
    %34 = arith.addf %31, %33 : vector<8x128xf32>
    %c0_17 = arith.constant 0 : index
    %c0_18 = arith.constant 0 : index
    %c0_19 = arith.constant 0 : index
    %35 = vector.load %arg7[%c0_17, %c0_18, %c0_19] : memref<1x8x128xf32, #tpu.memory_space<vmem>>, vector<1x8x128xf32>
    %36 = vector.shape_cast %35 : vector<1x8x128xf32> to vector<8x128xf32>
    %37 = vector.shape_cast %34 : vector<8x128xf32> to vector<1x8x128xf32>
    tpu.vector_store %arg7[%c0_17, %c0_18, %c0_19], %37 {strides = array<i32>} : memref<1x8x128xf32, #tpu.memory_space<vmem>>, vector<1x8x128xf32>,
    return
  }
  func.func @transform_0(%arg0: i32, %arg1: i32) -> (i32, i32) {
    %c0_i32 = arith.constant 0 : i32
    %c0_i32_0 = arith.constant 0 : i32
    %c0_i32_1 = arith.constant 0 : i32
    return %c0_i32, %c0_i32_0 : i32, i32
  }
  func.func @transform_1(%arg0: i32, %arg1: i32) -> (i32, i32) {
    %c1_i32 = arith.constant 1 : i32
    %0 = arith.muli %arg0, %c1_i32 : i32
    %1 = arith.addi %0, %arg1 : i32
    %c0_i32 = arith.constant 0 : i32
    %c0_i32_0 = arith.constant 0 : i32
    return %1, %c0_i32 : i32, i32
  }
  func.func @transform_2(%arg0: i32, %arg1: i32) -> (i32, i32) {
    %c1_i32 = arith.constant 1 : i32
    %0 = arith.muli %arg0, %c1_i32 : i32
    %1 = arith.addi %0, %arg1 : i32
    %c0_i32 = arith.constant 0 : i32
    %c0_i32_0 = arith.constant 0 : i32
    return %c0_i32, %1 : i32, i32
  }
  func.func @transform_3(%arg0: i32, %arg1: i32) -> (i32, i32) {
    %c1_i32 = arith.constant 1 : i32
    %0 = arith.muli %arg0, %c1_i32 : i32
    %1 = arith.addi %0, %arg1 : i32
    %c0_i32 = arith.constant 0 : i32
    %c0_i32_0 = arith.constant 0 : i32
    return %1, %c0_i32 : i32, i32
  }
  func.func @transform_4(%arg0: i32, %arg1: i32) -> (i32, i32) {
    %c0_i32 = arith.constant 0 : i32
    %c0_i32_0 = arith.constant 0 : i32
    %c0_i32_1 = arith.constant 0 : i32
    return %c0_i32, %c0_i32_0 : i32, i32
  }
  func.func @transform_5(%arg0: i32, %arg1: i32) -> (i32, i32, i32) {
    %c0_i32 = arith.constant 0 : i32
    %c0_i32_0 = arith.constant 0 : i32
    %c0_i32_1 = arith.constant 0 : i32
    return %arg0, %c0_i32, %c0_i32_0 : i32, i32, i32
  }
  func.func @transform_6(%arg0: i32, %arg1: i32) -> (i32, i32) {
    %c1_i32 = arith.constant 1 : i32
    %0 = arith.muli %arg0, %c1_i32 : i32
    %1 = arith.addi %0, %arg1 : i32
    %c0_i32 = arith.constant 0 : i32
    %c0_i32_0 = arith.constant 0 : i32
    return %c0_i32, %1 : i32, i32
  }
}

</mosaic_0001>

<llo_original>
// kernel: tpu_custom_call.1
$region0: #{tpu_custom_call.1}
  #allocation0 [shape = 'u32[]', space=smem, size = 0x4, offset = 0x4, fixed_abs, tag = 'smem constant byte address 0x4 - core index']
  #allocation1 [shape = 'u32[144,128]{1,0:T(1,128)}', space=vmem, size = 0x12000, scoped, tag = 'internal scratch']
  %s0 = inlined_call_operand.hbm [shape: f32[8,128], index: 0, kind: input, shape index: {}]
  %s1 = inlined_call_operand.hbm [shape: f32[128,128], index: 1, kind: input, shape index: {}]
  %s2 = inlined_call_operand.vmem [shape: f32[1,128], index: 2, kind: input, shape index: {}]
  %s3 = inlined_call_operand.hbm [shape: f32[128,128], index: 3, kind: input, shape index: {}]
  %s4 = inlined_call_operand.vmem [shape: f32[1,128], index: 4, kind: input, shape index: {}]
  %s5 = inlined_call_operand.hbm [shape: f32[1,8,128], index: 5, kind: output, shape index: {0}]
  %s6 = inlined_call_operand.hbm [shape: f32[8,128], index: 6, kind: output, shape index: {1}]
  %7 = xla_tuple %s5, %s6
  %s8 = sld [smem:[#allocation0]]
  $region54: #{tpu_custom_call.1} parent=0
    _
  %s10 = ssub.s32 1, %s8
  %s11 = scalar_select 0, %s10, %s8
  $region1: #{tpu_custom_call.1} parent=0
    #allocation2 [shape = 'u8[4096]{0}', space=vmem, size = 0x1000, scoped, tag = 'input window, operand 0, single buffered']
    #allocation3 [shape = 's32[1]{0}', space=sflag, size = 0x4, scoped, tag = 'scoped memory for tpu_custom_call.1']
    #allocation4 [shape = 's32[1]{0}', space=sflag, size = 0x4, scoped, tag = 'scoped memory for tpu_custom_call.1']
    #allocation5 [shape = 'u8[65536]{0}', space=vmem, size = 0x10000, scoped, tag = 'input window, operand 1, single buffered']
    #allocation6 [shape = 's32[1]{0}', space=sflag, size = 0x4, scoped, tag = 'scoped memory for tpu_custom_call.1']
    #allocation7 [shape = 'u8[65536]{0}', space=vmem, size = 0x10000, scoped, tag = 'input window, operand 3, single buffered']
    #allocation8 [shape = 'u8[4096]{0}', space=vmem, size = 0x1000, scoped, tag = 'output window, operand 0, single buffered']
    #allocation9 [shape = 'u8[4096]{0}', space=vmem, size = 0x1000, scoped, tag = 'output window, operand 1, single buffered']
    #allocation10 [shape = 's32[1]{0}', space=sflag, size = 0x4, scoped, tag = 'scoped memory for tpu_custom_call.1']
    %12 = vsyncpa [#allocation3], 0
    %13 = vsyncpa [#allocation6], 0
    %14 = vsyncpa [#allocation4], 0
    %15 = vsyncpa [#allocation10], 0
    // Predicated region
    $region2: #{tpu_custom_call.1} parent=1 // pred_check
      _
    $region3: #{tpu_custom_call.1} parent=1 // pred_check_branch
      %17 = sbr.rel (0) target = $region5
    $region4: #{tpu_custom_call.1} parent=1 // pred_region
      %s19 = ssub.s32 128, 128
      %20 = vsyncadd [#allocation3], %s19
      %s22 = sshll.u32 [#allocation2], 4
      %s23 = int_to_ptr.vmem [resolvable:$true] %s22
      %25 = dma.hbm_to_vmem [thread:$0]  %s0, 128, %s23, [#allocation3]
    $region5: #{tpu_custom_call.1} parent=1 // pred_fallthru
      _
    // Predicated region
    $region6: #{tpu_custom_call.1} parent=1 // pred_check
      _
    $region7: #{tpu_custom_call.1} parent=1 // pred_check_branch
      %27 = sbr.rel (0) target = $region9
    $region8: #{tpu_custom_call.1} parent=1 // pred_region
      %s28 = sadd.s32 0, 0
      %s29 = smul.u32 16, %s28
      %s31 = ssub.s32 2048, 2048
      %32 = vsyncadd [#allocation6], %s31
      %s33 = smul.addr %s29, 128
      %s34 = scalar_lea.hbm %s1, %s33
      %s35 = sshll.u32 [#allocation5], 4
      %s36 = int_to_ptr.vmem [resolvable:$true] %s35
      %41 = dma.hbm_to_vmem [thread:$0]  %s34, 2048, %s36, [#allocation6], 128, 128, 8
    $region9: #{tpu_custom_call.1} parent=1 // pred_fallthru
      _
    // Predicated region
    $region10: #{tpu_custom_call.1} parent=1 // pred_check
      _
    $region11: #{tpu_custom_call.1} parent=1 // pred_check_branch
      %43 = sbr.rel (0) target = $region13
    $region12: #{tpu_custom_call.1} parent=1 // pred_region
      %s44 = sadd.s32 0, 0
      %p45 = scmp.lt.s32.totalorder %s44, 0
      %s46 = scalar_select %p45, %s44, 0
      %s47 = scalar_lea.vmem %s2, %s46
      %s48 = sadd.s32 0, 0
    $region13: #{tpu_custom_call.1} parent=1 // pred_fallthru
      _
    // Predicated region
    $region14: #{tpu_custom_call.1} parent=1 // pred_check
      _
    $region15: #{tpu_custom_call.1} parent=1 // pred_check_branch
      %50 = sbr.rel (0) target = $region17
    $region16: #{tpu_custom_call.1} parent=1 // pred_region
      %s51 = sadd.s32 0, 0
      %s52 = smul.u32 16, %s51
      %s54 = ssub.s32 2048, 2048
      %55 = vsyncadd [#allocation6], %s54
      %s56 = smul.addr %s52, 128
      %s57 = scalar_lea.hbm %s3, %s56
      %s58 = sshll.u32 [#allocation7], 4
      %s59 = int_to_ptr.vmem [resolvable:$true] %s58
      %64 = dma.hbm_to_vmem [thread:$0]  %s57, 2048, %s59, [#allocation6], 128, 128, 8
    $region17: #{tpu_custom_call.1} parent=1 // pred_fallthru
      _
    // Predicated region
    $region18: #{tpu_custom_call.1} parent=1 // pred_check
      _
    $region19: #{tpu_custom_call.1} parent=1 // pred_check_branch
      %66 = sbr.rel (0) target = $region21
    $region20: #{tpu_custom_call.1} parent=1 // pred_region
      _
    $region21: #{tpu_custom_call.1} parent=1 // pred_fallthru
      _
    // Predicated region
    $region22: #{tpu_custom_call.1} parent=1 // pred_check
      _
    $region23: #{tpu_custom_call.1} parent=1 // pred_check_branch
      %68 = sbr.rel (0) target = $region25
    $region24: #{tpu_custom_call.1} parent=1 // pred_region
      %69 = dma.done [#allocation3], 128
    $region25: #{tpu_custom_call.1} parent=1 // pred_fallthru
      _
    // Predicated region
    $region26: #{tpu_custom_call.1} parent=1 // pred_check
      _
    $region27: #{tpu_custom_call.1} parent=1 // pred_check_branch
      %71 = sbr.rel (0) target = $region29
    $region28: #{tpu_custom_call.1} parent=1 // pred_region
      %72 = dma.done [#allocation6], 2048
    $region29: #{tpu_custom_call.1} parent=1 // pred_fallthru
      _
    // Predicated region
    $region30: #{tpu_custom_call.1} parent=1 // pred_check
      _
    $region31: #{tpu_custom_call.1} parent=1 // pred_check_branch
      %74 = sbr.rel (0) target = $region33
    $region32: #{tpu_custom_call.1} parent=1 // pred_region
      %75 = dma.done [#allocation6], 2048
    $region33: #{tpu_custom_call.1} parent=1 // pred_fallthru
      _
    %s76 = sadd.s32 0, 0
    %p77 = scmp.lt.s32.totalorder %s76, 0
    %s78 = scalar_select %p77, %s76, 0
    %s79 = scalar_lea.vmem %s2, %s78
    %s80 = sadd.s32 0, 0
    %s81 = smul.u32 16, %s80
    %s82 = sadd.s32 0, 0
    %p83 = scmp.lt.s32.totalorder %s82, 0
    %s84 = scalar_select %p83, %s82, 0
    %s85 = scalar_lea.vmem %s2, %s84
    %s86 = sadd.s32 0, 0
    %s87 = sadd.s32 0, 0
    %s88 = smul.u32 16, %s87
    %s89 = sadd.s32 0, 0
    %p90 = scmp.eq.s32.totalorder 0, 0
    // Predicated region
    $region34: #{tpu_custom_call.1} parent=1 // pred_check
      %p91 = pneg %p90
    $region35: #{tpu_custom_call.1} parent=1 // pred_check_branch
      %93 = sbr.rel (%p91) target = $region37
    $region36: #{tpu_custom_call.1} parent=1 // pred_region
      %p94 = scmp.eq.s32.totalorder 0, 0
      %s95 = scalar_select %p94, 1.0, 0.0
      %v96 = vld [vmem:[%s4] sm:$0x1]
      %v97 = vstv %s95
      %v98 = vmul.f32 %v96, %v97
      %v100 = vlaneseq
      %v101 = vshrl.u32 %v100, 7
      %v102 = vsub.s32 0, %v101
      %v103 = vrot.slane %v98, %v102
      %105 = vst [vmem:[#allocation8] sm:$0xff] %v103
    $region37: #{tpu_custom_call.1} parent=1 // pred_fallthru
      _
    %v106 = vld [vmem:[#allocation2] sm:$0xff]
    %v107 = vld [vmem:[#allocation5] sm:$0xff]
    %v108 = vld [vmem:[#allocation5 + $0x8] sm:$0xff]
    %v109 = vld [vmem:[#allocation5 + $0x10] sm:$0xff]
    %v110 = vld [vmem:[#allocation5 + $0x18] sm:$0xff]
    %v111 = vld [vmem:[#allocation5 + $0x20] sm:$0xff]
    %v112 = vld [vmem:[#allocation5 + $0x28] sm:$0xff]
    %v113 = vld [vmem:[#allocation5 + $0x30] sm:$0xff]
    %v114 = vld [vmem:[#allocation5 + $0x38] sm:$0xff]
    %v115 = vld [vmem:[#allocation5 + $0x40] sm:$0xff]
    %v116 = vld [vmem:[#allocation5 + $0x48] sm:$0xff]
    %v117 = vld [vmem:[#allocation5 + $0x50] sm:$0xff]
    %v118 = vld [vmem:[#allocation5 + $0x58] sm:$0xff]
    %v119 = vld [vmem:[#allocation5 + $0x60] sm:$0xff]
    %v120 = vld [vmem:[#allocation5 + $0x68] sm:$0xff]
    %v121 = vld [vmem:[#allocation5 + $0x70] sm:$0xff]
    %v122 = vld [vmem:[#allocation5 + $0x78] sm:$0xff]
    %v123 = vld [vmem:[%s85] sm:$0x1]
    %v125 = vlaneseq
    %v126 = vshrl.u32 %v125, 7
    %v127 = vsub.s32 0, %v126
    %v128 = vrot.slane %v123, %v127
    %130 = vmatprep.subr.mxu0 0.0
    %131 = vmatpush1.xpose.msra.mxu0 %v122
    %132 = vmatprep.subr.mxu0 0.0
    %133 = vmatpush1.xpose.msra.mxu0 %v121
    %134 = vmatprep.subr.mxu0 0.0
    %135 = vmatpush1.xpose.msra.mxu0 %v120
    %136 = vmatprep.subr.mxu0 0.0
    %137 = vmatpush1.xpose.msra.mxu0 %v119
    %138 = vmatprep.subr.mxu0 0.0
    %139 = vmatpush1.xpose.msra.mxu0 %v118
    %140 = vmatprep.subr.mxu0 0.0
    %141 = vmatpush1.xpose.msra.mxu0 %v117
    %142 = vmatprep.subr.mxu0 0.0
    %143 = vmatpush1.xpose.msra.mxu0 %v116
    %144 = vmatprep.subr.mxu0 0.0
    %145 = vmatpush1.xpose.msra.mxu0 %v115
    %146 = vmatprep.subr.mxu0 0.0
    %147 = vmatpush1.xpose.msra.mxu0 %v114
    %148 = vmatprep.subr.mxu0 0.0
    %149 = vmatpush1.xpose.msra.mxu0 %v113
    %150 = vmatprep.subr.mxu0 0.0
    %151 = vmatpush1.xpose.msra.mxu0 %v112
    %152 = vmatprep.subr.mxu0 0.0
    %153 = vmatpush1.xpose.msra.mxu0 %v111
    %154 = vmatprep.subr.mxu0 0.0
    %155 = vmatpush1.xpose.msra.mxu0 %v110
    %156 = vmatprep.subr.mxu0 0.0
    %157 = vmatpush1.xpose.msra.mxu0 %v109
    %158 = vmatprep.subr.mxu0 0.0
    %159 = vmatpush1.xpose.msra.mxu0 %v108
    %160 = vmatprep.subr.mxu0 0.0
    %161 = vmatpush1.xpose.msra.mxu0 %v107
    %162 = vmatprep.subr.mxu0 0.0
    %163 = vmatpush2.xpose.msra.mxu0 0.0
    %164 = vmatprep.subr.mxu0 0.0
    %165 = vmatpush2.xpose.msra.mxu0 0.0
    %166 = vmatprep.subr.mxu0 0.0
    %167 = vmatpush2.xpose.msra.mxu0 0.0
    %168 = vmatprep.subr.mxu0 0.0
    %169 = vmatpush2.xpose.msra.mxu0 0.0
    %170 = vmatprep.subr.mxu0 0.0
    %171 = vmatpush2.xpose.msra.mxu0 0.0
    %172 = vmatprep.subr.mxu0 0.0
    %173 = vmatpush2.xpose.msra.mxu0 0.0
    %174 = vmatprep.subr.mxu0 0.0
    %175 = vmatpush2.xpose.msra.mxu0 0.0
    %176 = vmatprep.subr.mxu0 0.0
    %177 = vmatpush2.xpose.msra.mxu0 0.0
    %178 = vmatprep.subr.mxu0 0.0
    %179 = vmatpush2.xpose.msra.mxu0 0.0
    %180 = vmatprep.subr.mxu0 0.0
    %181 = vmatpush2.xpose.msra.mxu0 0.0
    %182 = vmatprep.subr.mxu0 0.0
    %183 = vmatpush2.xpose.msra.mxu0 0.0
    %184 = vmatprep.subr.mxu0 0.0
    %185 = vmatpush2.xpose.msra.mxu0 0.0
    %186 = vmatprep.subr.mxu0 0.0
    %187 = vmatpush2.xpose.msra.mxu0 0.0
    %188 = vmatprep.subr.mxu0 0.0
    %189 = vmatpush2.xpose.msra.mxu0 0.0
    %190 = vmatprep.subr.mxu0 0.0
    %191 = vmatpush2.xpose.msra.mxu0 0.0
    %192 = vmatprep.subr.mxu0 0.0
    %193 = vmatpush2.xpose.msra.mxu0 0.0
    %194 = vmatprep.mubr.f32.mxu0 0.0
    %195 = vmatmul.mubr.f32.gmra.mxu0 %v106
    %v196 = vpop.f32.mrf.mxu0
    %v197 = vadd.f32 %v128, %v196
    %v198 = vpop.f32.mrf.mxu0
    %199 = vdwg.mxu0
    %v200 = vlaneseq
    %v201 = vshrl.u32 %v200, 7
    %vm203 = vcmp.lt.s32.totalorder %v197, 0
    %v204 = vxor.u32 %v197, 2147483647
    %v205 = vsel %vm203, %v204, %v197
    %v206 = vand.u32 %v205, 4294967288
    %v207 = vsub.s32 7, %v201
    %v208 = vor.u32 %v206, %v207
    %v209 = vrot.slane %v208, 4
    %vm210 = vcmp.gt.s32.totalorder %v208, %v209
    %v211 = vsel %vm210, %v208, %v209
    %v212 = vrot.slane %v211, 2
    %vm213 = vcmp.gt.s32.totalorder %v211, %v212
    %v214 = vsel %vm213, %v211, %v212
    %v215 = vrot.slane %v214, 1
    %vm216 = vcmp.gt.s32.totalorder %v214, %v215
    %v217 = vsel %vm216, %v214, %v215
    %vm218 = vcmp.eq.s32.totalorder %v208, %v217
    %v219 = vsel %vm218, %v197, 0.0
    %220 = vst [vmem:[#allocation9] sm:$0xff] %v219
    %v221 = vld [vmem:[#allocation8] sm:$0xff]
    %v222 = vld [vmem:[#allocation7] sm:$0xff]
    %v223 = vld [vmem:[#allocation7 + $0x8] sm:$0xff]
    %v224 = vld [vmem:[#allocation7 + $0x10] sm:$0xff]
    %v225 = vld [vmem:[#allocation7 + $0x18] sm:$0xff]
    %v226 = vld [vmem:[#allocation7 + $0x20] sm:$0xff]
    %v227 = vld [vmem:[#allocation7 + $0x28] sm:$0xff]
    %v228 = vld [vmem:[#allocation7 + $0x30] sm:$0xff]
    %v229 = vld [vmem:[#allocation7 + $0x38] sm:$0xff]
    %v230 = vld [vmem:[#allocation7 + $0x40] sm:$0xff]
    %v231 = vld [vmem:[#allocation7 + $0x48] sm:$0xff]
    %v232 = vld [vmem:[#allocation7 + $0x50] sm:$0xff]
    %v233 = vld [vmem:[#allocation7 + $0x58] sm:$0xff]
    %v234 = vld [vmem:[#allocation7 + $0x60] sm:$0xff]
    %v235 = vld [vmem:[#allocation7 + $0x68] sm:$0xff]
    %v236 = vld [vmem:[#allocation7 + $0x70] sm:$0xff]
    %v237 = vld [vmem:[#allocation7 + $0x78] sm:$0xff]
    %238 = vmatprep.subr.mxu0 0.0
    %239 = vmatpush1.msra.mxu0 %v237
    %240 = vmatprep.subr.mxu0 0.0
    %241 = vmatpush1.msra.mxu0 %v236
    %242 = vmatprep.subr.mxu0 0.0
    %243 = vmatpush1.msra.mxu0 %v235
    %244 = vmatprep.subr.mxu0 0.0
    %245 = vmatpush1.msra.mxu0 %v234
    %246 = vmatprep.subr.mxu0 0.0
    %247 = vmatpush1.msra.mxu0 %v233
    %248 = vmatprep.subr.mxu0 0.0
    %249 = vmatpush1.msra.mxu0 %v232
    %250 = vmatprep.subr.mxu0 0.0
    %251 = vmatpush1.msra.mxu0 %v231
    %252 = vmatprep.subr.mxu0 0.0
    %253 = vmatpush1.msra.mxu0 %v230
    %254 = vmatprep.subr.mxu0 0.0
    %255 = vmatpush1.msra.mxu0 %v229
    %256 = vmatprep.subr.mxu0 0.0
    %257 = vmatpush1.msra.mxu0 %v228
    %258 = vmatprep.subr.mxu0 0.0
    %259 = vmatpush1.msra.mxu0 %v227
    %260 = vmatprep.subr.mxu0 0.0
    %261 = vmatpush1.msra.mxu0 %v226
    %262 = vmatprep.subr.mxu0 0.0
    %263 = vmatpush1.msra.mxu0 %v225
    %264 = vmatprep.subr.mxu0 0.0
    %265 = vmatpush1.msra.mxu0 %v224
    %266 = vmatprep.subr.mxu0 0.0
    %267 = vmatpush1.msra.mxu0 %v223
    %268 = vmatprep.subr.mxu0 0.0
    %269 = vmatpush1.msra.mxu0 %v222
    %270 = vmatprep.subr.mxu0 0.0
    %271 = vmatpush2.msra.mxu0 0.0
    %272 = vmatprep.subr.mxu0 0.0
    %273 = vmatpush2.msra.mxu0 0.0
    %274 = vmatprep.subr.mxu0 0.0
    %275 = vmatpush2.msra.mxu0 0.0
    %276 = vmatprep.subr.mxu0 0.0
    %277 = vmatpush2.msra.mxu0 0.0
    %278 = vmatprep.subr.mxu0 0.0
    %279 = vmatpush2.msra.mxu0 0.0
    %280 = vmatprep.subr.mxu0 0.0
    %281 = vmatpush2.msra.mxu0 0.0
    %282 = vmatprep.subr.mxu0 0.0
    %283 = vmatpush2.msra.mxu0 0.0
    %284 = vmatprep.subr.mxu0 0.0
    %285 = vmatpush2.msra.mxu0 0.0
    %286 = vmatprep.subr.mxu0 0.0
    %287 = vmatpush2.msra.mxu0 0.0
    %288 = vmatprep.subr.mxu0 0.0
    %289 = vmatpush2.msra.mxu0 0.0
    %290 = vmatprep.subr.mxu0 0.0
    %291 = vmatpush2.msra.mxu0 0.0
    %292 = vmatprep.subr.mxu0 0.0
    %293 = vmatpush2.msra.mxu0 0.0
    %294 = vmatprep.subr.mxu0 0.0
    %295 = vmatpush2.msra.mxu0 0.0
    %296 = vmatprep.subr.mxu0 0.0
    %297 = vmatpush2.msra.mxu0 0.0
    %298 = vmatprep.subr.mxu0 0.0
    %299 = vmatpush2.msra.mxu0 0.0
    %300 = vmatprep.subr.mxu0 0.0
    %301 = vmatpush2.msra.mxu0 0.0
    %302 = vmatprep.mubr.f32.mxu0 0.0
    %303 = vmatmul.mubr.f32.gmra.mxu0 %v219
    %v304 = vpop.f32.mrf.mxu0
    %v305 = vadd.f32 0.0, %v304
    %v306 = vpop.f32.mrf.mxu0
    %307 = vdwg.mxu0
    %v308 = vadd.f32 %v221, %v305
    %309 = vst [vmem:[#allocation8] sm:$0xff] %v308
    // Predicated region
    $region38: #{tpu_custom_call.1} parent=1 // pred_check
      _
    $region39: #{tpu_custom_call.1} parent=1 // pred_check_branch
      %311 = sbr.rel (0) target = $region41
    $region40: #{tpu_custom_call.1} parent=1 // pred_region
      %s313 = ssub.s32 128, 128
      %314 = vsyncadd [#allocation4], %s313
      %s316 = sshll.u32 [#allocation8], 4
      %s317 = int_to_ptr.vmem [resolvable:$true] %s316
      %319 = dma.vmem_to_hbm [thread:$0]  %s317, 128, %s5, [#allocation4]
    $region41: #{tpu_custom_call.1} parent=1 // pred_fallthru
      _
    // Predicated region
    $region42: #{tpu_custom_call.1} parent=1 // pred_check
      _
    $region43: #{tpu_custom_call.1} parent=1 // pred_check_branch
      %321 = sbr.rel (0) target = $region45
    $region44: #{tpu_custom_call.1} parent=1 // pred_region
      %s322 = sadd.s32 0, 0
      %s324 = ssub.s32 128, 128
      %325 = vsyncadd [#allocation10], %s324
      %s326 = smul.addr %s322, 128
      %s327 = scalar_lea.hbm %s6, %s326
      %s329 = sshll.u32 [#allocation9], 4
      %s330 = int_to_ptr.vmem [resolvable:$true] %s329
      %332 = dma.vmem_to_hbm [thread:$0]  %s330, 128, %s327, [#allocation10]
    $region45: #{tpu_custom_call.1} parent=1 // pred_fallthru
      _
    // Predicated region
    $region46: #{tpu_custom_call.1} parent=1 // pred_check
      _
    $region47: #{tpu_custom_call.1} parent=1 // pred_check_branch
      %334 = sbr.rel (0) target = $region49
    $region48: #{tpu_custom_call.1} parent=1 // pred_region
      %335 = dma.done [#allocation4], 128
    $region49: #{tpu_custom_call.1} parent=1 // pred_fallthru
      _
    // Predicated region
    $region50: #{tpu_custom_call.1} parent=1 // pred_check
      _
    $region51: #{tpu_custom_call.1} parent=1 // pred_check_branch
      %337 = sbr.rel (0) target = $region53
    $region52: #{tpu_custom_call.1} parent=1 // pred_region
      %338 = dma.done [#allocation10], 128
    $region53: #{tpu_custom_call.1} parent=1 // pred_fallthru
      _
    %339 = vsyncpa [#allocation3], 1
    %340 = vsyncpa [#allocation6], 1
    %341 = vsyncpa [#allocation4], 1
    %342 = vsyncpa [#allocation10], 1

</llo_original>
